<compile_context>
chip_gen: v5e
topology: v5e:2x2
jax: 0.10.0
libtpu: 0.0.40
codegen_flags: <defaults>
</compile_context>

<pallas_src>
import functools

import jax
import jax.numpy as jnp
from jax.experimental import pallas as pl
from jax.experimental.pallas import tpu as pltpu


LANE = 128  # TPU lane width: keep all feature/edge/class dims lane-dense


def _round_up(x, m):
    return ((x + m - 1) // m) * m


def _pad_to(a, shape, value=0.0):
    pads = [(0, t - s) for s, t in zip(a.shape, shape)]
    if all(p == (0, 0) for p in pads):
        return a
    return jnp.pad(a, pads, constant_values=value)


# ----------------------------- fused Pallas kernel -------------------------- #

def _fused_hgnn_kernel(*refs, num_layers, eps, inv_n, matmul_dtype):
    """Entire forward pass in one kernel body; G and X never leave VMEM."""
    h_ref, x_ref = refs[0], refs[1]
    layer_refs = refs[2:2 + 4 * num_layers]
    wout_ref = refs[2 + 4 * num_layers]
    bout_ref = refs[3 + 4 * num_layers]
    o_ref = refs[4 + 4 * num_layers]

    # --- G = Dv^{-1/2} H We De^{-1} H^T Dv^{-1/2}   (We = I) ---
    # Built from ONE scaled copy:  H_s[i,e] = H[i,e] * dv[i] * sqrt(de[e])
    #   =>  G = H_s @ H_s^T   (mathematically identical: dv_i dv_j sum_e H_ie de_e H_je)
    # Degree sums accumulate in f32 even if H is stored bf16.
    Dv = jnp.sum(h_ref[...], axis=1, keepdims=True, dtype=jnp.float32)   # (N, 1)
    De = jnp.sum(h_ref[...], axis=0, keepdims=True, dtype=jnp.float32)   # (1, E_p)
    # rsqrt(0) for zero-degree nodes / zero-padded edge columns is finite on
    # TPU (no trap) and is masked out by the jnp.where below -- do NOT
    # "simplify" this into a pow(-0.5) that produces NaN/inf that survives.
    dv = jnp.where(Dv > 0.0, jax.lax.rsqrt(Dv), 0.0)          # Dv^{-1/2}
    sq_de = jnp.where(De > 0.0, jax.lax.rsqrt(De), 0.0)       # sqrt(De^{-1}), EUP slot
    H_s = (h_ref[...].astype(jnp.float32) * dv * sq_de).astype(matmul_dtype)
    # Contract on the trailing dim of both operands -- no explicit transpose.
    G = jax.lax.dot_general(H_s, H_s, (((1,), (1,)), ((), ())),
                            preferred_element_type=jnp.float32)
    Gm = G.astype(matmul_dtype)

    X = x_ref[...]                                            # already matmul_dtype
    for i in range(num_layers):
        w_ref, b_ref, gamma_ref, beta_ref = layer_refs[4 * i: 4 * i + 4]
        Y = jnp.dot(X, w_ref[...],
                    preferred_element_type=jnp.float32) + b_ref[...]
        Z = jnp.dot(Gm, Y.astype(matmul_dtype),
                    preferred_element_type=jnp.float32)
        # BatchNorm1d (training statistics, biased variance), two-pass centered
        # variance to avoid E[Z^2]-E[Z]^2 cancellation.
        mean = jnp.sum(Z, axis=0, keepdims=True) * inv_n
        Zc = Z - mean
        var = jnp.sum(Zc * Zc, axis=0, keepdims=True) * inv_n
        Zn = Zc * jax.lax.rsqrt(var + eps) * gamma_ref[...] + beta_ref[...]
        # LeakyReLU(0.1); keep X in matmul_dtype for the next layer's MXU dots.
        X = jnp.where(Zn >= 0.0, Zn, 0.1 * Zn).astype(matmul_dtype)

    Y = jnp.dot(X, wout_ref[...],
                preferred_element_type=jnp.float32) + bout_ref[...]
    o_ref[...] = jnp.dot(Gm, Y.astype(matmul_dtype),
                         preferred_element_type=jnp.float32)


# ----------------------------- pallas_call wrapper --------------------------- #

def multi_layered_hgnn_forward(X, H, params, *, eps=1e-5,
                               matmul_dtype=jnp.bfloat16):
    """Pads feature/edge/class dims to 128 lanes, pre-casts the matmul operands
    to `matmul_dtype` (bf16 by default -> MXU-rate matmuls with f32
    accumulation, half the HBM->VMEM DMA for H and the weights), runs the
    single fused kernel with every operand as a whole-array VMEM block, and
    slices the real class columns back out.

    matmul_dtype=jnp.float32 gives a bit-accurate (~1e-4) path for validation.
    """
    N, F = X.shape
    _, E = H.shape
    num_layers = len(params["layers"])
    hidden = params["layers"][0][0].shape[1]
    nb_classes = params["out"][0].shape[1]

    F_p = _round_up(F, LANE)
    E_p = _round_up(E, LANE)
    Hid_p = _round_up(hidden, LANE)
    C_p = _round_up(nb_classes, LANE)

    mm = jnp.dtype(matmul_dtype)
    inputs = [
        _pad_to(H.astype(mm), (N, E_p)),
        _pad_to(X.astype(mm), (N, F_p)),
    ]
    in_dim_p = F_p
    for (W, b, gamma, beta) in params["layers"]:
        inputs.append(_pad_to(W.astype(mm), (in_dim_p, Hid_p)))
        inputs.append(_pad_to(b.astype(jnp.float32), (1, Hid_p)))
        inputs.append(_pad_to(gamma.astype(jnp.float32), (1, Hid_p), value=1.0))
        inputs.append(_pad_to(beta.astype(jnp.float32), (1, Hid_p)))
        in_dim_p = Hid_p
    W_out, b_out = params["out"]
    inputs.append(_pad_to(W_out.astype(mm), (Hid_p, C_p)))
    inputs.append(_pad_to(b_out.astype(jnp.float32), (1, C_p)))

    # Scoped-VMEM budget: the default limit (16 MiB v5e, 32 MiB v6e/v7x) is far
    # below physical VMEM; size the limit from the actual resident footprint so
    # the compiler neither spills nor rejects early.
    mm_bytes = mm.itemsize
    fp = 0
    fp += N * E_p * (mm_bytes + 4 + mm_bytes)       # H input + f32 upcast temp + H_s
    fp += N * N * (4 + mm_bytes)                    # G (f32) + Gm
    fp += N * F_p * mm_bytes                        # X input
    fp += N * Hid_p * (mm_bytes + 3 * 4)            # running X + Y/Z/Zc f32 temps
    fp += N * C_p * 4 * 2                           # final Y + output
    for a in inputs[2:]:                            # weights / biases / bn params
        fp += a.size * a.dtype.itemsize
    vmem_limit = max(16 << 20, min(int(fp * 1.5) + (4 << 20), 100 << 20))

    vmem_spec = pl.BlockSpec(memory_space=pltpu.MemorySpace.VMEM)
    out_padded = pl.pallas_call(
        functools.partial(_fused_hgnn_kernel, num_layers=num_layers, eps=eps,
                          inv_n=1.0 / N, matmul_dtype=mm),
        out_shape=jax.ShapeDtypeStruct((N, C_p), jnp.float32),
        in_specs=[vmem_spec] * len(inputs),
        out_specs=vmem_spec,
        compiler_params=pltpu.CompilerParams(vmem_limit_bytes=vmem_limit),
    )(*inputs)
    return out_padded[:, :nb_classes]


# --------------------------- parameter construction ------------------------- #

def init_params(key, nb_classes, sz_embed, hidden, num_layers):
    params = {"layers": [], "out": None}
    for i in range(num_layers):
        d_in = sz_embed if i == 0 else hidden
        key, kw, kb = jax.random.split(key, 3)
        bound = 1.0 / jnp.sqrt(d_in)
        W = jax.random.uniform(kw, (d_in, hidden), jnp.float32, -bound, bound)
        b = jax.random.uniform(kb, (1, hidden), jnp.float32, -bound, bound)
        gamma = jnp.ones((1, hidden), jnp.float32)   # BatchNorm1d default weight
        beta = jnp.zeros((1, hidden), jnp.float32)   # BatchNorm1d default bias
        params["layers"].append((W, b, gamma, beta))
    key, kw, kb = jax.random.split(key, 3)
    bound = 1.0 / jnp.sqrt(hidden)
    W_out = jax.random.uniform(kw, (hidden, nb_classes), jnp.float32, -bound, bound)
    b_out = jax.random.uniform(kb, (1, nb_classes), jnp.float32, -bound, bound)
    params["out"] = (W_out, b_out)
    return params


# ------------------------------ pure-JAX reference -------------------------- #

def reference_forward(X, H, params, eps=1e-5):
    Dv = H.sum(axis=1)
    De = H.sum(axis=0)
    dv = Dv ** -0.5
    de = De ** -1.0
    G = (dv[:, None] * H * de[None, :]) @ (H * dv[:, None]).T
    for (W, b, gamma, beta) in params["layers"]:
        Z = G @ (X @ W + b)
        mean = Z.mean(axis=0, keepdims=True)
        var = ((Z - mean) ** 2).mean(axis=0, keepdims=True)
        Z = (Z - mean) / jnp.sqrt(var + eps) * gamma + beta
        X = jnp.where(Z >= 0.0, Z, 0.1 * Z)
    W_out, b_out = params["out"]
    return G @ (X @ W_out + b_out)


# ----------------------------------- main ----------------------------------- #

if __name__ == "__main__":
    nb_classes, sz_embed, hidden, num_layers = 8, 32, 32, 2
    n_nodes, n_edges = 16, 16

    key = jax.random.PRNGKey(0)
    kx, kh, kp = jax.random.split(key, 3)

    X = jax.random.normal(kx, (n_nodes, sz_embed), jnp.float32)
    # strictly-positive "soft" incidence so degree inverses are finite
    H = jax.random.uniform(kh, (n_nodes, n_edges), jnp.float32, 0.1, 1.0)

    params = init_params(kp, nb_classes, sz_embed, hidden, num_layers)
    ref = reference_forward(X, H, params)

    # Performance path: bf16 MXU matmuls with f32 accumulation (loosened tol).
    fwd_bf16 = jax.jit(multi_layered_hgnn_forward)
    out = jax.block_until_ready(fwd_bf16(X, H, params))
    assert out.shape == (n_nodes, nb_classes)
    assert jnp.allclose(out, ref, atol=5e-2, rtol=5e-2), "bf16 path mismatch"

    # Validation path: f32 matmuls, tight tolerance.
    fwd_f32 = jax.jit(functools.partial(multi_layered_hgnn_forward,
                                        matmul_dtype=jnp.float32))
    out32 = jax.block_until_ready(fwd_f32(X, H, params))
    assert jnp.allclose(out32, ref, atol=1e-4, rtol=1e-4), "f32 path mismatch"

    print("KERNEL_OK")
</pallas_src>

<mosaic_0001>
module attributes {stable_mosaic.version = 11 : i64} {
  func.func @_fused_hgnn_kernel(%arg0: memref<16x128xbf16, #tpu.memory_space<vmem>>, %arg1: memref<16x128xbf16, #tpu.memory_space<vmem>>, %arg2: memref<128x128xbf16, #tpu.memory_space<vmem>>, %arg3: memref<1x128xf32, #tpu.memory_space<vmem>>, %arg4: memref<1x128xf32, #tpu.memory_space<vmem>>, %arg5: memref<1x128xf32, #tpu.memory_space<vmem>>, %arg6: memref<128x128xbf16, #tpu.memory_space<vmem>>, %arg7: memref<1x128xf32, #tpu.memory_space<vmem>>, %arg8: memref<1x128xf32, #tpu.memory_space<vmem>>, %arg9: memref<1x128xf32, #tpu.memory_space<vmem>>, %arg10: memref<128x128xbf16, #tpu.memory_space<vmem>>, %arg11: memref<1x128xf32, #tpu.memory_space<vmem>>, %arg12: memref<16x128xf32, #tpu.memory_space<vmem>>) attributes {dimension_semantics = [], scalar_prefetch = 0 : i64, scratch_operands = 0 : i64, tpu.core_type = #tpu.core_type<tc>} {
    %c0 = arith.constant 0 : index
    %c0_0 = arith.constant 0 : index
    %0 = vector.load %arg0[%c0, %c0_0] : memref<16x128xbf16, #tpu.memory_space<vmem>>, vector<16x128xbf16>
    %1 = arith.extf %0 : vector<16x128xbf16> to vector<16x128xf32>
    %cst = arith.constant dense<0.000000e+00> : vector<16xf32>
    %2 = vector.multi_reduction <add>, %1, %cst [1] : vector<16x128xf32> to vector<16xf32>
    %3 = vector.shape_cast %2 : vector<16xf32> to vector<16x1xf32>
    %c0_1 = arith.constant 0 : index
    %c0_2 = arith.constant 0 : index
    %4 = vector.load %arg0[%c0_1, %c0_2] : memref<16x128xbf16, #tpu.memory_space<vmem>>, vector<16x128xbf16>
    %5 = arith.extf %4 : vector<16x128xbf16> to vector<16x128xf32>
    %cst_3 = arith.constant dense<0.000000e+00> : vector<128xf32>
    %6 = vector.multi_reduction <add>, %5, %cst_3 [0] : vector<16x128xf32> to vector<128xf32>
    %7 = vector.shape_cast %6 : vector<128xf32> to vector<1x128xf32>
    %cst_4 = arith.constant 0.000000e+00 : f32
    %8 = vector.broadcast %cst_4 : f32 to vector<16x1xf32>
    %9 = arith.cmpf ogt, %3, %8 : vector<16x1xf32>
    %10 = math.rsqrt %3 : vector<16x1xf32>
    %cst_5 = arith.constant 0.000000e+00 : f32
    %11 = vector.broadcast %cst_5 : f32 to vector<16x1xf32>
    %12 = arith.select %9, %10, %11 : vector<16x1xi1>, vector<16x1xf32>
    %cst_6 = arith.constant 0.000000e+00 : f32
    %13 = vector.broadcast %cst_6 : f32 to vector<1x128xf32>
    %14 = arith.cmpf ogt, %7, %13 : vector<1x128xf32>
    %15 = math.rsqrt %7 : vector<1x128xf32>
    %cst_7 = arith.constant 0.000000e+00 : f32
    %16 = vector.broadcast %cst_7 : f32 to vector<1x128xf32>
    %17 = arith.select %14, %15, %16 : vector<1x128xi1>, vector<1x128xf32>
    %c0_8 = arith.constant 0 : index
    %c0_9 = arith.constant 0 : index
    %18 = vector.load %arg0[%c0_8, %c0_9] : memref<16x128xbf16, #tpu.memory_space<vmem>>, vector<16x128xbf16>
    %19 = arith.extf %18 : vector<16x128xbf16> to vector<16x128xf32>
    %20 = vector.broadcast %12 : vector<16x1xf32> to vector<16x128xf32>
    %21 = arith.mulf %19, %20 : vector<16x128xf32>
    %22 = vector.broadcast %17 : vector<1x128xf32> to vector<16x128xf32>
    %23 = arith.mulf %21, %22 : vector<16x128xf32>
    %24 = arith.truncf %23 : vector<16x128xf32> to vector<16x128xbf16>
    %cst_10 = arith.constant dense<0.000000e+00> : vector<16x16xf32>
    %25 = tpu.matmul %24, %24, %cst_10 {dimension_numbers = #tpu.dot_dimension_numbers<[1], [1], [0], [0], [0, 0, 1, 0], [], []>} : vector<16x128xbf16>, vector<16x128xbf16>, vector<16x16xf32> -> vector<16x16xf32>
    %26 = arith.truncf %25 : vector<16x16xf32> to vector<16x16xbf16>
    %c0_11 = arith.constant 0 : index
    %c0_12 = arith.constant 0 : index
    %27 = vector.load %arg1[%c0_11, %c0_12] : memref<16x128xbf16, #tpu.memory_space<vmem>>, vector<16x128xbf16>
    %c0_13 = arith.constant 0 : index
    %c0_14 = arith.constant 0 : index
    %28 = vector.load %arg2[%c0_13, %c0_14] : memref<128x128xbf16, #tpu.memory_space<vmem>>, vector<128x128xbf16>
    %cst_15 = arith.constant dense<0.000000e+00> : vector<16x128xf32>
    %29 = tpu.matmul %27, %28, %cst_15 {dimension_numbers = #tpu.dot_dimension_numbers<[1], [0], [0], [1], [0, 0, 1, 1], [], []>} : vector<16x128xbf16>, vector<128x128xbf16>, vector<16x128xf32> -> vector<16x128xf32>
    %c0_16 = arith.constant 0 : index
    %c0_17 = arith.constant 0 : index
    %30 = vector.load %arg3[%c0_16, %c0_17] : memref<1x128xf32, #tpu.memory_space<vmem>>, vector<1x128xf32>
    %31 = vector.broadcast %30 : vector<1x128xf32> to vector<16x128xf32>
    %32 = arith.addf %29, %31 : vector<16x128xf32>
    %33 = arith.truncf %32 : vector<16x128xf32> to vector<16x128xbf16>
    %cst_18 = arith.constant dense<0.000000e+00> : vector<16x128xf32>
    %34 = tpu.matmul %26, %33, %cst_18 {dimension_numbers = #tpu.dot_dimension_numbers<[1], [0], [0], [1], [0, 0, 1, 1], [], []>} : vector<16x16xbf16>, vector<16x128xbf16>, vector<16x128xf32> -> vector<16x128xf32>
    %cst_19 = arith.constant dense<0.000000e+00> : vector<128xf32>
    %35 = vector.multi_reduction <add>, %34, %cst_19 [0] : vector<16x128xf32> to vector<128xf32>
    %36 = vector.shape_cast %35 : vector<128xf32> to vector<1x128xf32>
    %cst_20 = arith.constant 6.250000e-02 : f32
    %37 = vector.broadcast %cst_20 : f32 to vector<1x128xf32>
    %38 = arith.mulf %36, %37 : vector<1x128xf32>
    %39 = vector.broadcast %38 : vector<1x128xf32> to vector<16x128xf32>
    %40 = arith.subf %34, %39 : vector<16x128xf32>
    %41 = arith.mulf %40, %40 : vector<16x128xf32>
    %cst_21 = arith.constant dense<0.000000e+00> : vector<128xf32>
    %42 = vector.multi_reduction <add>, %41, %cst_21 [0] : vector<16x128xf32> to vector<128xf32>
    %43 = vector.shape_cast %42 : vector<128xf32> to vector<1x128xf32>
    %cst_22 = arith.constant 6.250000e-02 : f32
    %44 = vector.broadcast %cst_22 : f32 to vector<1x128xf32>
    %45 = arith.mulf %43, %44 : vector<1x128xf32>
    %cst_23 = arith.constant 9.99999974E-6 : f32
    %46 = vector.broadcast %cst_23 : f32 to vector<1x128xf32>
    %47 = arith.addf %45, %46 : vector<1x128xf32>
    %48 = math.rsqrt %47 : vector<1x128xf32>
    %49 = vector.broadcast %48 : vector<1x128xf32> to vector<16x128xf32>
    %50 = arith.mulf %40, %49 : vector<16x128xf32>
    %c0_24 = arith.constant 0 : index
    %c0_25 = arith.constant 0 : index
    %51 = vector.load %arg4[%c0_24, %c0_25] : memref<1x128xf32, #tpu.memory_space<vmem>>, vector<1x128xf32>
    %52 = vector.broadcast %51 : vector<1x128xf32> to vector<16x128xf32>
    %53 = arith.mulf %50, %52 : vector<16x128xf32>
    %c0_26 = arith.constant 0 : index
    %c0_27 = arith.constant 0 : index
    %54 = vector.load %arg5[%c0_26, %c0_27] : memref<1x128xf32, #tpu.memory_space<vmem>>, vector<1x128xf32>
    %55 = vector.broadcast %54 : vector<1x128xf32> to vector<16x128xf32>
    %56 = arith.addf %53, %55 : vector<16x128xf32>
    %cst_28 = arith.constant 0.000000e+00 : f32
    %57 = vector.broadcast %cst_28 : f32 to vector<16x128xf32>
    %58 = arith.cmpf oge, %56, %57 : vector<16x128xf32>
    %cst_29 = arith.constant 1.000000e-01 : f32
    %59 = vector.broadcast %cst_29 : f32 to vector<16x128xf32>
    %60 = arith.mulf %59, %56 : vector<16x128xf32>
    %61 = arith.select %58, %56, %60 : vector<16x128xi1>, vector<16x128xf32>
    %62 = arith.truncf %61 : vector<16x128xf32> to vector<16x128xbf16>
    %c0_30 = arith.constant 0 : index
    %c0_31 = arith.constant 0 : index
    %63 = vector.load %arg6[%c0_30, %c0_31] : memref<128x128xbf16, #tpu.memory_space<vmem>>, vector<128x128xbf16>
    %cst_32 = arith.constant dense<0.000000e+00> : vector<16x128xf32>
    %64 = tpu.matmul %62, %63, %cst_32 {dimension_numbers = #tpu.dot_dimension_numbers<[1], [0], [0], [1], [0, 0, 1, 1], [], []>} : vector<16x128xbf16>, vector<128x128xbf16>, vector<16x128xf32> -> vector<16x128xf32>
    %c0_33 = arith.constant 0 : index
    %c0_34 = arith.constant 0 : index
    %65 = vector.load %arg7[%c0_33, %c0_34] : memref<1x128xf32, #tpu.memory_space<vmem>>, vector<1x128xf32>
    %66 = vector.broadcast %65 : vector<1x128xf32> to vector<16x128xf32>
    %67 = arith.addf %64, %66 : vector<16x128xf32>
    %68 = arith.truncf %67 : vector<16x128xf32> to vector<16x128xbf16>
    %cst_35 = arith.constant dense<0.000000e+00> : vector<16x128xf32>
    %69 = tpu.matmul %26, %68, %cst_35 {dimension_numbers = #tpu.dot_dimension_numbers<[1], [0], [0], [1], [0, 0, 1, 1], [], []>} : vector<16x16xbf16>, vector<16x128xbf16>, vector<16x128xf32> -> vector<16x128xf32>
    %cst_36 = arith.constant dense<0.000000e+00> : vector<128xf32>
    %70 = vector.multi_reduction <add>, %69, %cst_36 [0] : vector<16x128xf32> to vector<128xf32>
    %71 = vector.shape_cast %70 : vector<128xf32> to vector<1x128xf32>
    %cst_37 = arith.constant 6.250000e-02 : f32
    %72 = vector.broadcast %cst_37 : f32 to vector<1x128xf32>
    %73 = arith.mulf %71, %72 : vector<1x128xf32>
    %74 = vector.broadcast %73 : vector<1x128xf32> to vector<16x128xf32>
    %75 = arith.subf %69, %74 : vector<16x128xf32>
    %76 = arith.mulf %75, %75 : vector<16x128xf32>
    %cst_38 = arith.constant dense<0.000000e+00> : vector<128xf32>
    %77 = vector.multi_reduction <add>, %76, %cst_38 [0] : vector<16x128xf32> to vector<128xf32>
    %78 = vector.shape_cast %77 : vector<128xf32> to vector<1x128xf32>
    %cst_39 = arith.constant 6.250000e-02 : f32
    %79 = vector.broadcast %cst_39 : f32 to vector<1x128xf32>
    %80 = arith.mulf %78, %79 : vector<1x128xf32>
    %cst_40 = arith.constant 9.99999974E-6 : f32
    %81 = vector.broadcast %cst_40 : f32 to vector<1x128xf32>
    %82 = arith.addf %80, %81 : vector<1x128xf32>
    %83 = math.rsqrt %82 : vector<1x128xf32>
    %84 = vector.broadcast %83 : vector<1x128xf32> to vector<16x128xf32>
    %85 = arith.mulf %75, %84 : vector<16x128xf32>
    %c0_41 = arith.constant 0 : index
    %c0_42 = arith.constant 0 : index
    %86 = vector.load %arg8[%c0_41, %c0_42] : memref<1x128xf32, #tpu.memory_space<vmem>>, vector<1x128xf32>
    %87 = vector.broadcast %86 : vector<1x128xf32> to vector<16x128xf32>
    %88 = arith.mulf %85, %87 : vector<16x128xf32>
    %c0_43 = arith.constant 0 : index
    %c0_44 = arith.constant 0 : index
    %89 = vector.load %arg9[%c0_43, %c0_44] : memref<1x128xf32, #tpu.memory_space<vmem>>, vector<1x128xf32>
    %90 = vector.broadcast %89 : vector<1x128xf32> to vector<16x128xf32>
    %91 = arith.addf %88, %90 : vector<16x128xf32>
    %cst_45 = arith.constant 0.000000e+00 : f32
    %92 = vector.broadcast %cst_45 : f32 to vector<16x128xf32>
    %93 = arith.cmpf oge, %91, %92 : vector<16x128xf32>
    %cst_46 = arith.constant 1.000000e-01 : f32
    %94 = vector.broadcast %cst_46 : f32 to vector<16x128xf32>
    %95 = arith.mulf %94, %91 : vector<16x128xf32>
    %96 = arith.select %93, %91, %95 : vector<16x128xi1>, vector<16x128xf32>
    %97 = arith.truncf %96 : vector<16x128xf32> to vector<16x128xbf16>
    %c0_47 = arith.constant 0 : index
    %c0_48 = arith.constant 0 : index
    %98 = vector.load %arg10[%c0_47, %c0_48] : memref<128x128xbf16, #tpu.memory_space<vmem>>, vector<128x128xbf16>
    %cst_49 = arith.constant dense<0.000000e+00> : vector<16x128xf32>
    %99 = tpu.matmul %97, %98, %cst_49 {dimension_numbers = #tpu.dot_dimension_numbers<[1], [0], [0], [1], [0, 0, 1, 1], [], []>} : vector<16x128xbf16>, vector<128x128xbf16>, vector<16x128xf32> -> vector<16x128xf32>
    %c0_50 = arith.constant 0 : index
    %c0_51 = arith.constant 0 : index
    %100 = vector.load %arg11[%c0_50, %c0_51] : memref<1x128xf32, #tpu.memory_space<vmem>>, vector<1x128xf32>
    %101 = vector.broadcast %100 : vector<1x128xf32> to vector<16x128xf32>
    %102 = arith.addf %99, %101 : vector<16x128xf32>
    %103 = arith.truncf %102 : vector<16x128xf32> to vector<16x128xbf16>
    %cst_52 = arith.constant dense<0.000000e+00> : vector<16x128xf32>
    %104 = tpu.matmul %26, %103, %cst_52 {dimension_numbers = #tpu.dot_dimension_numbers<[1], [0], [0], [1], [0, 0, 1, 1], [], []>} : vector<16x16xbf16>, vector<16x128xbf16>, vector<16x128xf32> -> vector<16x128xf32>
    %c0_53 = arith.constant 0 : index
    %c0_54 = arith.constant 0 : index
    %105 = vector.load %arg12[%c0_53, %c0_54] : memref<16x128xf32, #tpu.memory_space<vmem>>, vector<16x128xf32>
    tpu.vector_store %arg12[%c0_53, %c0_54], %104 {strides = array<i32>} : memref<16x128xf32, #tpu.memory_space<vmem>>, vector<16x128xf32>,
    return
  }
}

</mosaic_0001>

<llo_original>
// kernel: multi_layered_hgnn_forward.1
$region0: #{multi_layered_hgnn_forward.1}
  #allocation0 [shape = 'u32[]', space=smem, size = 0x4, offset = 0x4, fixed_abs, tag = 'smem constant byte address 0x4 - core index']
  #allocation1 [shape = 'u32[72,128]{1,0:T(1,128)}', space=vmem, size = 0x9000, scoped, tag = 'internal scratch']
  %s0 = inlined_call_operand.vmem [shape: bf16[16,128], index: 0, kind: input, shape index: {}]
  %s1 = inlined_call_operand.vmem [shape: bf16[16,128], index: 1, kind: input, shape index: {}]
  %s2 = inlined_call_operand.vmem [shape: bf16[128,128], index: 2, kind: input, shape index: {}]
  %s3 = inlined_call_operand.vmem [shape: f32[1,128], index: 3, kind: input, shape index: {}]
  %s4 = inlined_call_operand.vmem [shape: f32[1,128], index: 4, kind: input, shape index: {}]
  %s5 = inlined_call_operand.vmem [shape: f32[1,128], index: 5, kind: input, shape index: {}]
  %s6 = inlined_call_operand.vmem [shape: bf16[128,128], index: 6, kind: input, shape index: {}]
  %s7 = inlined_call_operand.vmem [shape: f32[1,128], index: 7, kind: input, shape index: {}]
  %s8 = inlined_call_operand.vmem [shape: f32[1,128], index: 8, kind: input, shape index: {}]
  %s9 = inlined_call_operand.vmem [shape: f32[1,128], index: 9, kind: input, shape index: {}]
  %s10 = inlined_call_operand.vmem [shape: bf16[128,128], index: 10, kind: input, shape index: {}]
  %s11 = inlined_call_operand.vmem [shape: f32[1,128], index: 11, kind: input, shape index: {}]
  %s12 = inlined_call_operand.vmem [shape: f32[16,128], index: 12, kind: output, shape index: {}]
  %s13 = sld [smem:[#allocation0]]
  $region58: #{multi_layered_hgnn_forward.1} parent=0
    _
  %s15 = ssub.s32 1, %s13
  %s16 = scalar_select 0, %s15, %s13
  // Predicated region
  $region2: #{multi_layered_hgnn_forward.1} parent=0 // pred_check
    _
  $region3: #{multi_layered_hgnn_forward.1} parent=0 // pred_check_branch
    %18 = sbr.rel (0) target = $region5
  $region4: #{multi_layered_hgnn_forward.1} parent=0 // pred_region
    _
  $region5: #{multi_layered_hgnn_forward.1} parent=0 // pred_fallthru
    _
  // Predicated region
  $region6: #{multi_layered_hgnn_forward.1} parent=0 // pred_check
    _
  $region7: #{multi_layered_hgnn_forward.1} parent=0 // pred_check_branch
    %20 = sbr.rel (0) target = $region9
  $region8: #{multi_layered_hgnn_forward.1} parent=0 // pred_region
    _
  $region9: #{multi_layered_hgnn_forward.1} parent=0 // pred_fallthru
    _
  // Predicated region
  $region10: #{multi_layered_hgnn_forward.1} parent=0 // pred_check
    _
  $region11: #{multi_layered_hgnn_forward.1} parent=0 // pred_check_branch
    %22 = sbr.rel (0) target = $region13
  $region12: #{multi_layered_hgnn_forward.1} parent=0 // pred_region
    _
  $region13: #{multi_layered_hgnn_forward.1} parent=0 // pred_fallthru
    _
  // Predicated region
  $region14: #{multi_layered_hgnn_forward.1} parent=0 // pred_check
    _
  $region15: #{multi_layered_hgnn_forward.1} parent=0 // pred_check_branch
    %24 = sbr.rel (0) target = $region17
  $region16: #{multi_layered_hgnn_forward.1} parent=0 // pred_region
    _
  $region17: #{multi_layered_hgnn_forward.1} parent=0 // pred_fallthru
    _
  // Predicated region
  $region18: #{multi_layered_hgnn_forward.1} parent=0 // pred_check
    _
  $region19: #{multi_layered_hgnn_forward.1} parent=0 // pred_check_branch
    %26 = sbr.rel (0) target = $region21
  $region20: #{multi_layered_hgnn_forward.1} parent=0 // pred_region
    _
  $region21: #{multi_layered_hgnn_forward.1} parent=0 // pred_fallthru
    _
  // Predicated region
  $region22: #{multi_layered_hgnn_forward.1} parent=0 // pred_check
    _
  $region23: #{multi_layered_hgnn_forward.1} parent=0 // pred_check_branch
    %28 = sbr.rel (0) target = $region25
  $region24: #{multi_layered_hgnn_forward.1} parent=0 // pred_region
    _
  $region25: #{multi_layered_hgnn_forward.1} parent=0 // pred_fallthru
    _
  // Predicated region
  $region26: #{multi_layered_hgnn_forward.1} parent=0 // pred_check
    _
  $region27: #{multi_layered_hgnn_forward.1} parent=0 // pred_check_branch
    %30 = sbr.rel (0) target = $region29
  $region28: #{multi_layered_hgnn_forward.1} parent=0 // pred_region
    _
  $region29: #{multi_layered_hgnn_forward.1} parent=0 // pred_fallthru
    _
  // Predicated region
  $region30: #{multi_layered_hgnn_forward.1} parent=0 // pred_check
    _
  $region31: #{multi_layered_hgnn_forward.1} parent=0 // pred_check_branch
    %32 = sbr.rel (0) target = $region33
  $region32: #{multi_layered_hgnn_forward.1} parent=0 // pred_region
    _
  $region33: #{multi_layered_hgnn_forward.1} parent=0 // pred_fallthru
    _
  // Predicated region
  $region34: #{multi_layered_hgnn_forward.1} parent=0 // pred_check
    _
  $region35: #{multi_layered_hgnn_forward.1} parent=0 // pred_check_branch
    %34 = sbr.rel (0) target = $region37
  $region36: #{multi_layered_hgnn_forward.1} parent=0 // pred_region
    _
  $region37: #{multi_layered_hgnn_forward.1} parent=0 // pred_fallthru
    _
  // Predicated region
  $region38: #{multi_layered_hgnn_forward.1} parent=0 // pred_check
    _
  $region39: #{multi_layered_hgnn_forward.1} parent=0 // pred_check_branch
    %36 = sbr.rel (0) target = $region41
  $region40: #{multi_layered_hgnn_forward.1} parent=0 // pred_region
    _
  $region41: #{multi_layered_hgnn_forward.1} parent=0 // pred_fallthru
    _
  // Predicated region
  $region42: #{multi_layered_hgnn_forward.1} parent=0 // pred_check
    _
  $region43: #{multi_layered_hgnn_forward.1} parent=0 // pred_check_branch
    %38 = sbr.rel (0) target = $region45
  $region44: #{multi_layered_hgnn_forward.1} parent=0 // pred_region
    _
  $region45: #{multi_layered_hgnn_forward.1} parent=0 // pred_fallthru
    _
  // Predicated region
  $region46: #{multi_layered_hgnn_forward.1} parent=0 // pred_check
    _
  $region47: #{multi_layered_hgnn_forward.1} parent=0 // pred_check_branch
    %40 = sbr.rel (0) target = $region49
  $region48: #{multi_layered_hgnn_forward.1} parent=0 // pred_region
    _
  $region49: #{multi_layered_hgnn_forward.1} parent=0 // pred_fallthru
    _
  %v42 = vld [vmem:[%s0] sm:$0xf]
  %v43 = vld [vmem:[%s0 + $0x4] sm:$0xf]
  %v44 = vunpack.c.l.bf16 %v42
  %v45 = vunpack.c.l.bf16 %v43
  %46 = vadd.xlane.f32.xlu0 %v44
  %v47 = vpop.xlane.xlu0 %46
  %48 = vadd.xlane.f32.xlu0 %v45
  %v49 = vpop.xlane.xlu0 %48
  %v50 = vadd.f32 %v44, %v45
  %v51 = vrot.slane %v50, 4
  %v52 = vadd.f32 %v50, %v51
  %v53 = vrot.slane %v52, 2
  %v54 = vadd.f32 %v52, %v53
  %v55 = vrot.slane %v54, 1
  %v56 = vadd.f32 %v54, %v55
  %vm57 = vcmp.gt.f32.partialorder %v47, 0.0
  %vm58 = vcmp.gt.f32.partialorder %v49, 0.0
  %v59 = vrsqrt.pop %v47
  %v60 = vmul.f32 %v59, %v47
  %v61 = vmul.f32 %v60, %v59
  %v62 = vmul.f32 0.5, %v61
  %v63 = vsub.f32 1.5, %v62
  %v64 = vmul.f32 %v59, %v63
  %vm65 = vweird.f32 %v47
  %vm66 = vweird.f32 %v59
  %vm67 = vmor %vm65, %vm66
  %v68 = vsel %vm67, %v59, %v64
  %v69 = vrsqrt.pop %v49
  %v70 = vmul.f32 %v69, %v49
  %v71 = vmul.f32 %v70, %v69
  %v72 = vmul.f32 0.5, %v71
  %v73 = vsub.f32 1.5, %v72
  %v74 = vmul.f32 %v69, %v73
  %vm75 = vweird.f32 %v49
  %vm76 = vweird.f32 %v69
  %vm77 = vmor %vm75, %vm76
  %v78 = vsel %vm77, %v69, %v74
  %v79 = vsel %vm57, %v68, 0.0
  %v80 = vsel %vm58, %v78, 0.0
  %vm81 = vcmp.gt.f32.partialorder %v56, 0.0
  %v82 = vrsqrt.pop %v56
  %v83 = vmul.f32 %v82, %v56
  %v84 = vmul.f32 %v83, %v82
  %v85 = vmul.f32 0.5, %v84
  %v86 = vsub.f32 1.5, %v85
  %v87 = vmul.f32 %v82, %v86
  %vm88 = vweird.f32 %v56
  %vm89 = vweird.f32 %v82
  %vm90 = vmor %vm88, %vm89
  %v91 = vsel %vm90, %v82, %v87
  %v92 = vsel %vm81, %v91, 0.0
  %v93 = vmul.f32 %v44, %v79
  %v94 = vmul.f32 %v45, %v80
  %v95 = vmul.f32 %v93, %v92
  %v96 = vmul.f32 %v94, %v92
  %v97 = vpack.c.bf16 %v96, %v95
  %98 = vmatpush.bf16.xpose.msra.mxu0 0
  %99 = vmatpush.bf16.xpose.msra.mxu0 0
  %100 = vmatpush.bf16.xpose.msra.mxu0 0
  %101 = vmatpush.bf16.xpose.msra.mxu0 0
  %102 = vmatpush.bf16.xpose.msra.mxu0 0
  %103 = vmatpush.bf16.xpose.msra.mxu0 0
  %104 = vmatpush.bf16.xpose.msra.mxu0 0
  %105 = vmatpush.bf16.xpose.msra.mxu0 %v97
  %106 = vmatmul.bf16.gmra.mxu0 %v97
  %v107 = vpop.f32.mrf.mxu0
  %v108 = vadd.f32 0.0, %v107
  %v109 = vpop.f32.mrf.mxu0
  %v110 = vadd.f32 0.0, %v109
  %111 = vdwg.mxu0
  %v112 = vpack.c.bf16 %v110, %v108
  %v113 = vld [vmem:[%s1] sm:$0xf]
  %v114 = vld [vmem:[%s1 + $0x4] sm:$0xf]
  %v115 = vld [vmem:[%s2] sm:$0xf]
  %v116 = vld [vmem:[%s2 + $0x4] sm:$0xf]
  %v117 = vld [vmem:[%s2 + $0x8] sm:$0xf]
  %v118 = vld [vmem:[%s2 + $0xc] sm:$0xf]
  %v119 = vld [vmem:[%s2 + $0x10] sm:$0xf]
  %v120 = vld [vmem:[%s2 + $0x14] sm:$0xf]
  %v121 = vld [vmem:[%s2 + $0x18] sm:$0xf]
  %v122 = vld [vmem:[%s2 + $0x1c] sm:$0xf]
  %v123 = vld [vmem:[%s2 + $0x20] sm:$0xf]
  %v124 = vld [vmem:[%s2 + $0x24] sm:$0xf]
  %v125 = vld [vmem:[%s2 + $0x28] sm:$0xf]
  %v126 = vld [vmem:[%s2 + $0x2c] sm:$0xf]
  %v127 = vld [vmem:[%s2 + $0x30] sm:$0xf]
  %v128 = vld [vmem:[%s2 + $0x34] sm:$0xf]
  %v129 = vld [vmem:[%s2 + $0x38] sm:$0xf]
  %v130 = vld [vmem:[%s2 + $0x3c] sm:$0xf]
  %v131 = vld [vmem:[%s3] sm:$0x1]
  %v133 = vperm.slane %v131, 0
  %v137 = vunpack.c.l.b16 %v113
  %v138 = vunpack.c.l.b16 %v114
  %v139 = vpack.c.b16 %v138, %v137
  %v157 = vunpack.c.l.b16 %v115
  %v158 = vunpack.c.l.b16 %v116
  %v159 = vunpack.c.l.b16 %v117
  %v160 = vunpack.c.l.b16 %v118
  %v161 = vunpack.c.l.b16 %v119
  %v162 = vunpack.c.l.b16 %v120
  %v163 = vunpack.c.l.b16 %v121
  %v164 = vunpack.c.l.b16 %v122
  %v165 = vunpack.c.l.b16 %v123
  %v166 = vunpack.c.l.b16 %v124
  %v167 = vunpack.c.l.b16 %v125
  %v168 = vunpack.c.l.b16 %v126
  %v169 = vunpack.c.l.b16 %v127
  %v170 = vunpack.c.l.b16 %v128
  %v171 = vunpack.c.l.b16 %v129
  %v172 = vunpack.c.l.b16 %v130
  %v173 = vpack.c.b16 %v158, %v157
  %v174 = vpack.c.b16 %v160, %v159
  %v175 = vpack.c.b16 %v162, %v161
  %v176 = vpack.c.b16 %v164, %v163
  %v177 = vpack.c.b16 %v166, %v165
  %v178 = vpack.c.b16 %v168, %v167
  %v179 = vpack.c.b16 %v170, %v169
  %v180 = vpack.c.b16 %v172, %v171
  %189 = vmatpush.bf16.msra.mxu0 %v180
  %190 = vmatpush.bf16.msra.mxu0 %v179
  %191 = vmatpush.bf16.msra.mxu0 %v178
  %192 = vmatpush.bf16.msra.mxu0 %v177
  %193 = vmatpush.bf16.msra.mxu0 %v176
  %194 = vmatpush.bf16.msra.mxu0 %v175
  %195 = vmatpush.bf16.msra.mxu0 %v174
  %196 = vmatpush.bf16.msra.mxu0 %v173
  %197 = vmatmul.bf16.gmra.mxu0 %v139
  %v198 = vpop.f32.mrf.mxu0
  %v199 = vadd.f32 %v133, %v198
  %v200 = vpop.f32.mrf.mxu0
  %v201 = vadd.f32 %v133, %v200
  %202 = vdwg.mxu0
  %v203 = vpack.c.bf16 %v201, %v199
  %vm204 = vcmask 130048
  %v206 = vsel %vm204, %v112, 0
  %208 = vmatpush.bf16.msra.mxu0 0
  %209 = vmatpush.bf16.msra.mxu0 0
  %210 = vmatpush.bf16.msra.mxu0 0
  %211 = vmatpush.bf16.msra.mxu0 0
  %212 = vmatpush.bf16.msra.mxu0 0
  %213 = vmatpush.bf16.msra.mxu0 0
  %214 = vmatpush.bf16.msra.mxu0 0
  %215 = vmatpush.bf16.msra.mxu0 %v203
  %216 = vmatmul.bf16.gmra.mxu0 %v206
  %v217 = vpop.f32.mrf.mxu0
  %v218 = vadd.f32 0.0, %v217
  %v219 = vpop.f32.mrf.mxu0
  %v220 = vadd.f32 0.0, %v219
  %221 = vdwg.mxu0
  %v222 = vadd.f32 %v218, %v220
  %v223 = vrot.slane %v222, 4
  %v224 = vadd.f32 %v222, %v223
  %v225 = vrot.slane %v224, 2
  %v226 = vadd.f32 %v224, %v225
  %v227 = vrot.slane %v226, 1
  %v228 = vadd.f32 %v226, %v227
  %v229 = vmul.f32 %v228, 0.0625
  %v230 = vsub.f32 %v218, %v229
  %v231 = vsub.f32 %v220, %v229
  %v232 = vmul.f32 %v230, %v230
  %v233 = vmul.f32 %v231, %v231
  %v234 = vadd.f32 %v232, %v233
  %v235 = vrot.slane %v234, 4
  %v236 = vadd.f32 %v234, %v235
  %v237 = vrot.slane %v236, 2
  %v238 = vadd.f32 %v236, %v237
  %v239 = vrot.slane %v238, 1
  %v240 = vadd.f32 %v238, %v239
  %v241 = vmul.f32 %v240, 0.0625
  %v242 = vadd.f32 %v241, 1e-05
  %v243 = vrsqrt.pop %v242
  %v244 = vmul.f32 %v243, %v242
  %v245 = vmul.f32 %v244, %v243
  %v246 = vmul.f32 0.5, %v245
  %v247 = vsub.f32 1.5, %v246
  %v248 = vmul.f32 %v243, %v247
  %vm249 = vweird.f32 %v242
  %vm250 = vweird.f32 %v243
  %vm251 = vmor %vm249, %vm250
  %v252 = vsel %vm251, %v243, %v248
  %v253 = vmul.f32 %v230, %v252
  %v254 = vmul.f32 %v231, %v252
  %v255 = vld [vmem:[%s4] sm:$0x1]
  %v257 = vperm.slane %v255, 0
  %v259 = vmul.f32 %v253, %v257
  %v260 = vmul.f32 %v254, %v257
  %v261 = vld [vmem:[%s5] sm:$0x1]
  %v263 = vperm.slane %v261, 0
  %v265 = vadd.f32 %v259, %v263
  %v266 = vadd.f32 %v260, %v263
  %vm267 = vcmp.ge.f32.partialorder %v265, 0.0
  %vm268 = vcmp.ge.f32.partialorder %v266, 0.0
  %v269 = vmul.f32 %v265, 0.1
  %v270 = vmul.f32 %v266, 0.1
  %v271 = vsel %vm267, %v265, %v269
  %v272 = vsel %vm268, %v266, %v270
  %v273 = vpack.c.bf16 %v272, %v271
  %v274 = vld [vmem:[%s6] sm:$0xf]
  %v275 = vld [vmem:[%s6 + $0x4] sm:$0xf]
  %v276 = vld [vmem:[%s6 + $0x8] sm:$0xf]
  %v277 = vld [vmem:[%s6 + $0xc] sm:$0xf]
  %v278 = vld [vmem:[%s6 + $0x10] sm:$0xf]
  %v279 = vld [vmem:[%s6 + $0x14] sm:$0xf]
  %v280 = vld [vmem:[%s6 + $0x18] sm:$0xf]
  %v281 = vld [vmem:[%s6 + $0x1c] sm:$0xf]
  %v282 = vld [vmem:[%s6 + $0x20] sm:$0xf]
  %v283 = vld [vmem:[%s6 + $0x24] sm:$0xf]
  %v284 = vld [vmem:[%s6 + $0x28] sm:$0xf]
  %v285 = vld [vmem:[%s6 + $0x2c] sm:$0xf]
  %v286 = vld [vmem:[%s6 + $0x30] sm:$0xf]
  %v287 = vld [vmem:[%s6 + $0x34] sm:$0xf]
  %v288 = vld [vmem:[%s6 + $0x38] sm:$0xf]
  %v289 = vld [vmem:[%s6 + $0x3c] sm:$0xf]
  %v290 = vld [vmem:[%s7] sm:$0x1]
  %v292 = vperm.slane %v290, 0
  %v310 = vunpack.c.l.b16 %v274
  %v311 = vunpack.c.l.b16 %v275
  %v312 = vunpack.c.l.b16 %v276
  %v313 = vunpack.c.l.b16 %v277
  %v314 = vunpack.c.l.b16 %v278
  %v315 = vunpack.c.l.b16 %v279
  %v316 = vunpack.c.l.b16 %v280
  %v317 = vunpack.c.l.b16 %v281
  %v318 = vunpack.c.l.b16 %v282
  %v319 = vunpack.c.l.b16 %v283
  %v320 = vunpack.c.l.b16 %v284
  %v321 = vunpack.c.l.b16 %v285
  %v322 = vunpack.c.l.b16 %v286
  %v323 = vunpack.c.l.b16 %v287
  %v324 = vunpack.c.l.b16 %v288
  %v325 = vunpack.c.l.b16 %v289
  %v326 = vpack.c.b16 %v311, %v310
  %v327 = vpack.c.b16 %v313, %v312
  %v328 = vpack.c.b16 %v315, %v314
  %v329 = vpack.c.b16 %v317, %v316
  %v330 = vpack.c.b16 %v319, %v318
  %v331 = vpack.c.b16 %v321, %v320
  %v332 = vpack.c.b16 %v323, %v322
  %v333 = vpack.c.b16 %v325, %v324
  %342 = vmatpush.bf16.msra.mxu0 %v333
  %343 = vmatpush.bf16.msra.mxu0 %v332
  %344 = vmatpush.bf16.msra.mxu0 %v331
  %345 = vmatpush.bf16.msra.mxu0 %v330
  %346 = vmatpush.bf16.msra.mxu0 %v329
  %347 = vmatpush.bf16.msra.mxu0 %v328
  %348 = vmatpush.bf16.msra.mxu0 %v327
  %349 = vmatpush.bf16.msra.mxu0 %v326
  %350 = vmatmul.bf16.gmra.mxu0 %v273
  %v351 = vpop.f32.mrf.mxu0
  %v352 = vadd.f32 %v292, %v351
  %v353 = vpop.f32.mrf.mxu0
  %v354 = vadd.f32 %v292, %v353
  %355 = vdwg.mxu0
  %v356 = vpack.c.bf16 %v354, %v352
  %357 = vmatpush.bf16.msra.mxu0 0
  %358 = vmatpush.bf16.msra.mxu0 0
  %359 = vmatpush.bf16.msra.mxu0 0
  %360 = vmatpush.bf16.msra.mxu0 0
  %361 = vmatpush.bf16.msra.mxu0 0
  %362 = vmatpush.bf16.msra.mxu0 0
  %363 = vmatpush.bf16.msra.mxu0 0
  %364 = vmatpush.bf16.msra.mxu0 %v356
  %365 = vmatmul.bf16.gmra.mxu0 %v206
  %v366 = vpop.f32.mrf.mxu0
  %v367 = vadd.f32 0.0, %v366
  %v368 = vpop.f32.mrf.mxu0
  %v369 = vadd.f32 0.0, %v368
  %370 = vdwg.mxu0
  %v371 = vadd.f32 %v367, %v369
  %v372 = vrot.slane %v371, 4
  %v373 = vadd.f32 %v371, %v372
  %v374 = vrot.slane %v373, 2
  %v375 = vadd.f32 %v373, %v374
  %v376 = vrot.slane %v375, 1
  %v377 = vadd.f32 %v375, %v376
  %v378 = vmul.f32 %v377, 0.0625
  %v379 = vsub.f32 %v367, %v378
  %v380 = vsub.f32 %v369, %v378
  %v381 = vmul.f32 %v379, %v379
  %v382 = vmul.f32 %v380, %v380
  %v383 = vadd.f32 %v381, %v382
  %v384 = vrot.slane %v383, 4
  %v385 = vadd.f32 %v383, %v384
  %v386 = vrot.slane %v385, 2
  %v387 = vadd.f32 %v385, %v386
  %v388 = vrot.slane %v387, 1
  %v389 = vadd.f32 %v387, %v388
  %v390 = vmul.f32 %v389, 0.0625
  %v391 = vadd.f32 %v390, 1e-05
  %v392 = vrsqrt.pop %v391
  %v393 = vmul.f32 %v392, %v391
  %v394 = vmul.f32 %v393, %v392
  %v395 = vmul.f32 0.5, %v394
  %v396 = vsub.f32 1.5, %v395
  %v397 = vmul.f32 %v392, %v396
  %vm398 = vweird.f32 %v391
  %vm399 = vweird.f32 %v392
  %vm400 = vmor %vm398, %vm399
  %v401 = vsel %vm400, %v392, %v397
  %v402 = vmul.f32 %v379, %v401
  %v403 = vmul.f32 %v380, %v401
  %v404 = vld [vmem:[%s8] sm:$0x1]
  %v406 = vperm.slane %v404, 0
  %v408 = vmul.f32 %v402, %v406
  %v409 = vmul.f32 %v403, %v406
  %v410 = vld [vmem:[%s9] sm:$0x1]
  %v412 = vperm.slane %v410, 0
  %v414 = vadd.f32 %v408, %v412
  %v415 = vadd.f32 %v409, %v412
  %vm416 = vcmp.ge.f32.partialorder %v414, 0.0
  %vm417 = vcmp.ge.f32.partialorder %v415, 0.0
  %v418 = vmul.f32 %v414, 0.1
  %v419 = vmul.f32 %v415, 0.1
  %v420 = vsel %vm416, %v414, %v418
  %v421 = vsel %vm417, %v415, %v419
  %v422 = vpack.c.bf16 %v421, %v420
  %v423 = vld [vmem:[%s10] sm:$0xf]
  %v424 = vld [vmem:[%s10 + $0x4] sm:$0xf]
  %v425 = vld [vmem:[%s10 + $0x8] sm:$0xf]
  %v426 = vld [vmem:[%s10 + $0xc] sm:$0xf]
  %v427 = vld [vmem:[%s10 + $0x10] sm:$0xf]
  %v428 = vld [vmem:[%s10 + $0x14] sm:$0xf]
  %v429 = vld [vmem:[%s10 + $0x18] sm:$0xf]
  %v430 = vld [vmem:[%s10 + $0x1c] sm:$0xf]
  %v431 = vld [vmem:[%s10 + $0x20] sm:$0xf]
  %v432 = vld [vmem:[%s10 + $0x24] sm:$0xf]
  %v433 = vld [vmem:[%s10 + $0x28] sm:$0xf]
  %v434 = vld [vmem:[%s10 + $0x2c] sm:$0xf]
  %v435 = vld [vmem:[%s10 + $0x30] sm:$0xf]
  %v436 = vld [vmem:[%s10 + $0x34] sm:$0xf]
  %v437 = vld [vmem:[%s10 + $0x38] sm:$0xf]
  %v438 = vld [vmem:[%s10 + $0x3c] sm:$0xf]
  %v439 = vld [vmem:[%s11] sm:$0x1]
  %v441 = vperm.slane %v439, 0
  %v459 = vunpack.c.l.b16 %v423
  %v460 = vunpack.c.l.b16 %v424
  %v461 = vunpack.c.l.b16 %v425
  %v462 = vunpack.c.l.b16 %v426
  %v463 = vunpack.c.l.b16 %v427
  %v464 = vunpack.c.l.b16 %v428
  %v465 = vunpack.c.l.b16 %v429
  %v466 = vunpack.c.l.b16 %v430
  %v467 = vunpack.c.l.b16 %v431
  %v468 = vunpack.c.l.b16 %v432
  %v469 = vunpack.c.l.b16 %v433
  %v470 = vunpack.c.l.b16 %v434
  %v471 = vunpack.c.l.b16 %v435
  %v472 = vunpack.c.l.b16 %v436
  %v473 = vunpack.c.l.b16 %v437
  %v474 = vunpack.c.l.b16 %v438
  %v475 = vpack.c.b16 %v460, %v459
  %v476 = vpack.c.b16 %v462, %v461
  %v477 = vpack.c.b16 %v464, %v463
  %v478 = vpack.c.b16 %v466, %v465
  %v479 = vpack.c.b16 %v468, %v467
  %v480 = vpack.c.b16 %v470, %v469
  %v481 = vpack.c.b16 %v472, %v471
  %v482 = vpack.c.b16 %v474, %v473
  %491 = vmatpush.bf16.msra.mxu0 %v482
  %492 = vmatpush.bf16.msra.mxu0 %v481
  %493 = vmatpush.bf16.msra.mxu0 %v480
  %494 = vmatpush.bf16.msra.mxu0 %v479
  %495 = vmatpush.bf16.msra.mxu0 %v478
  %496 = vmatpush.bf16.msra.mxu0 %v477
  %497 = vmatpush.bf16.msra.mxu0 %v476
  %498 = vmatpush.bf16.msra.mxu0 %v475
  %499 = vmatmul.bf16.gmra.mxu0 %v422
  %v500 = vpop.f32.mrf.mxu0
  %v501 = vadd.f32 %v441, %v500
  %v502 = vpop.f32.mrf.mxu0
  %v503 = vadd.f32 %v441, %v502
  %504 = vdwg.mxu0
  %v505 = vpack.c.bf16 %v503, %v501
  %506 = vmatpush.bf16.msra.mxu0 0
  %507 = vmatpush.bf16.msra.mxu0 0
  %508 = vmatpush.bf16.msra.mxu0 0
  %509 = vmatpush.bf16.msra.mxu0 0
  %510 = vmatpush.bf16.msra.mxu0 0
  %511 = vmatpush.bf16.msra.mxu0 0
  %512 = vmatpush.bf16.msra.mxu0 0
  %513 = vmatpush.bf16.msra.mxu0 %v505
  %514 = vmatmul.bf16.gmra.mxu0 %v206
  %v515 = vpop.f32.mrf.mxu0
  %v516 = vadd.f32 0.0, %v515
  %v517 = vpop.f32.mrf.mxu0
  %v518 = vadd.f32 0.0, %v517
  %519 = vdwg.mxu0
  %520 = vst [vmem:[%s12] sm:$0xff] %v516
  %521 = vst [vmem:[%s12 + $0x8] sm:$0xff] %v518
  // Predicated region
  $region50: #{multi_layered_hgnn_forward.1} parent=0 // pred_check
    _
  $region51: #{multi_layered_hgnn_forward.1} parent=0 // pred_check_branch
    %523 = sbr.rel (0) target = $region53
  $region52: #{multi_layered_hgnn_forward.1} parent=0 // pred_region
    _
  $region53: #{multi_layered_hgnn_forward.1} parent=0 // pred_fallthru
    _
  // Predicated region
  $region54: #{multi_layered_hgnn_forward.1} parent=0 // pred_check
    _
  $region55: #{multi_layered_hgnn_forward.1} parent=0 // pred_check_branch
    %525 = sbr.rel (0) target = $region57
  $region56: #{multi_layered_hgnn_forward.1} parent=0 // pred_region
    _
  $region57: #{multi_layered_hgnn_forward.1} parent=0 // pred_fallthru
    _

</llo_original>
